<compile_context>
chip_gen: v5e
topology: v5e:2x2
jax: 0.10.0
libtpu: 0.0.40
codegen_flags: <defaults>
</compile_context>

<pallas_src>
import functools

import jax
import jax.numpy as jnp
from jax import lax
from jax.experimental import pallas as pl
from jax.experimental.pallas import tpu as pltpu


def _hinge_tile_kernel(x_ref, t_ref, out_ref, *, margin, m, n, need_mask):
    """Process one (TM, TN) tile of input1 with the matching (TN, TM) tile of
    target. Emits an (8, TN) lane-dense partial-sum strip (f32)."""
    i = pl.program_id(0)
    j = pl.program_id(1)
    tm, tn = x_ref.shape

    x = x_ref[...].astype(jnp.float32)      # (TM, TN) tile of input1[M, N]
    t = t_ref[...].astype(jnp.float32)      # (TN, TM) tile of target[N, M]

    # Per-tile transpose (XLU) so the hinge runs in input1's (TM, TN) layout.
    loss = jnp.maximum(margin - t.T * x, 0.0)          # (TM, TN)

    if need_mask:
        # Zero out padded rows/cols of ragged edge tiles so the mean is exact
        # (padded reads are undefined and margin>0 would otherwise bias it).
        row = i * tm + lax.broadcasted_iota(jnp.int32, (tm, tn), 0)
        col = j * tn + lax.broadcasted_iota(jnp.int32, (tm, tn), 1)
        loss = jnp.where((row < m) & (col < n), loss, 0.0)

    # Fold rows into an 8-sublane strip: pure VPU adds on vreg-aligned slices,
    # no cross-lane XLU reduce and no per-step scalar SMEM store.
    full_groups = tm // 8
    strip = jnp.zeros((8, tn), jnp.float32)
    for r in range(full_groups):
        strip = strip + loss[r * 8:(r + 1) * 8, :]
    rem = tm - full_groups * 8
    if rem:  # only for tiny, non-8-aligned whole-dim tiles
        tail = jnp.concatenate(
            [loss[full_groups * 8:tm, :],
             jnp.zeros((8 - rem, tn), jnp.float32)], axis=0)
        strip = strip + tail

    out_ref[...] = strip


def hinge_loss(input1, target, margin=1.0, *, tm=512, tn=512):
    """mean(clamp(-target * input1.T + margin, min=0)).

    input1: [M, N]; target: [N, M].  float32 or bfloat16 inputs accepted.
    """
    M, N = input1.shape
    assert target.shape == (N, M), "target must match input1.t() shape"

    # Tile sizes: if a dim fits in one tile, take it whole (block == full dim
    # is always legal for both the natural and the index-swapped BlockSpec);
    # otherwise use a multiple of 128 so both specs satisfy the (8,128) rule.
    TM = M if M <= tm else max(128, (tm // 128) * 128)
    TN = N if N <= tn else max(128, (tn // 128) * 128)
    gm = pl.cdiv(M, TM)
    gn = pl.cdiv(N, TN)
    need_mask = (M % TM != 0) or (N % TN != 0)

    kernel = functools.partial(
        _hinge_tile_kernel, margin=float(margin), m=M, n=N, need_mask=need_mask)

    partials = pl.pallas_call(
        kernel,
        out_shape=jax.ShapeDtypeStruct((gm * 8, gn * TN), jnp.float32),
        grid=(gm, gn),
        in_specs=[
            pl.BlockSpec((TM, TN), lambda i, j: (i, j)),   # input1 tile
            pl.BlockSpec((TN, TM), lambda i, j: (j, i)),   # matching target tile
        ],
        out_specs=pl.BlockSpec((8, TN), lambda i, j: (i, j)),
        compiler_params=pltpu.CompilerParams(
            dimension_semantics=("parallel", "parallel"),
            vmem_limit_bytes=32 * 1024 * 1024,
        ),
    )(input1, target)

    # Final scalar collapse of the tiny partial-sum array; divide by the TRUE
    # element count (not the padded one).
    return jnp.sum(partials) * (1.0 / float(M * N))


if __name__ == "__main__":
    key = jax.random.PRNGKey(0)
    k1, k2 = jax.random.split(key)

    # Case 1: multi-tile grid with ragged edges (exercises masking and both
    # parallel grid axes) at small shapes.
    M, N = 200, 384
    input1 = jax.random.normal(k1, (M, N), dtype=jnp.float32)
    target = jnp.where(
        jax.random.uniform(k2, (N, M)) > 0.5, 1.0, -1.0).astype(jnp.float32)

    loss = hinge_loss(input1, target, margin=1.0, tm=128, tn=128)
    jax.block_until_ready(loss)
    ref = jnp.mean(jnp.maximum(-target * input1.T + 1.0, 0.0))
    assert jnp.allclose(loss, ref, atol=1e-5, rtol=1e-4), (loss, ref)

    # Case 2: tiny single-tile shapes (whole-dim blocks, no masking).
    M2, N2 = 24, 40
    x2 = jax.random.normal(k1, (M2, N2), dtype=jnp.float32)
    t2 = jnp.where(
        jax.random.uniform(k2, (N2, M2)) > 0.5, 1.0, -1.0).astype(jnp.float32)
    loss2 = hinge_loss(x2, t2, margin=0.5)
    jax.block_until_ready(loss2)
    ref2 = jnp.mean(jnp.maximum(-t2 * x2.T + 0.5, 0.0))
    assert jnp.allclose(loss2, ref2, atol=1e-5, rtol=1e-4), (loss2, ref2)

    # Case 3: bfloat16 inputs (halves HBM traffic; kernel accumulates in f32).
    xb = input1.astype(jnp.bfloat16)
    tb = target.astype(jnp.bfloat16)
    loss3 = hinge_loss(xb, tb, margin=1.0)
    jax.block_until_ready(loss3)
    ref3 = jnp.mean(jnp.maximum(
        -tb.astype(jnp.float32) * xb.astype(jnp.float32).T + 1.0, 0.0))
    assert jnp.allclose(loss3, ref3, atol=1e-5, rtol=1e-4), (loss3, ref3)

    print("KERNEL_OK")
</pallas_src>

<mosaic_0001>
module attributes {stable_mosaic.version = 11 : i64} {
  func.func @_hinge_tile_kernel(%arg0: i32, %arg1: i32, %arg2: memref<128x128xf32, #tpu.memory_space<vmem>>, %arg3: memref<128x128xf32, #tpu.memory_space<vmem>>, %arg4: memref<8x128xf32, #tpu.memory_space<vmem>>) attributes {dimension_semantics = [#tpu.dimension_semantics<parallel>, #tpu.dimension_semantics<parallel>], iteration_bounds = array<i64: 2, 3>, scalar_prefetch = 0 : i64, scratch_operands = 0 : i64, tpu.core_type = #tpu.core_type<tc>, window_params = [{transform_indices = @transform_0, window_bounds = array<i64: 128, 128>}, {transform_indices = @transform_1, window_bounds = array<i64: 128, 128>}, {transform_indices = @transform_2, window_bounds = array<i64: 8, 128>}]} {
    %c0 = arith.constant 0 : index
    %c0_0 = arith.constant 0 : index
    %0 = vector.load %arg2[%c0, %c0_0] : memref<128x128xf32, #tpu.memory_space<vmem>>, vector<128x128xf32>
    %c0_1 = arith.constant 0 : index
    %c0_2 = arith.constant 0 : index
    %1 = vector.load %arg3[%c0_1, %c0_2] : memref<128x128xf32, #tpu.memory_space<vmem>>, vector<128x128xf32>
    %2 = tpu.transpose %1, [1, 0] : vector<128x128xf32> -> vector<128x128xf32>
    %3 = arith.mulf %2, %0 : vector<128x128xf32>
    %cst = arith.constant 1.000000e+00 : f32
    %4 = vector.broadcast %cst : f32 to vector<128x128xf32>
    %5 = arith.subf %4, %3 : vector<128x128xf32>
    %cst_3 = arith.constant 0.000000e+00 : f32
    %6 = vector.broadcast %cst_3 : f32 to vector<128x128xf32>
    %7 = arith.maximumf %5, %6 : vector<128x128xf32>
    %c128_i32 = arith.constant 128 : i32
    %8 = arith.muli %arg0, %c128_i32 : i32
    %9 = tpu.iota {dimensions = array<i32: 0>} : vector<128x128xi32>
    %10 = vector.broadcast %8 : i32 to vector<128x128xi32>
    %11 = arith.addi %10, %9 : vector<128x128xi32>
    %c128_i32_4 = arith.constant 128 : i32
    %12 = arith.muli %arg1, %c128_i32_4 : i32
    %13 = tpu.iota {dimensions = array<i32: 1>} : vector<128x128xi32>
    %14 = vector.broadcast %12 : i32 to vector<128x128xi32>
    %15 = arith.addi %14, %13 : vector<128x128xi32>
    %c200_i32 = arith.constant 200 : i32
    %16 = vector.broadcast %c200_i32 : i32 to vector<128x128xi32>
    %17 = arith.cmpi slt, %11, %16 : vector<128x128xi32>
    %c384_i32 = arith.constant 384 : i32
    %18 = vector.broadcast %c384_i32 : i32 to vector<128x128xi32>
    %19 = arith.cmpi slt, %15, %18 : vector<128x128xi32>
    %20 = arith.andi %17, %19 : vector<128x128xi1>
    %cst_5 = arith.constant 0.000000e+00 : f32
    %21 = vector.broadcast %cst_5 : f32 to vector<128x128xf32>
    %22 = arith.select %20, %7, %21 : vector<128x128xi1>, vector<128x128xf32>
    %cst_6 = arith.constant 0.000000e+00 : f32
    %23 = vector.broadcast %cst_6 : f32 to vector<8x128xf32>
    %24 = vector.extract_strided_slice %22 {offsets = [0, 0], sizes = [8, 128], strides = [1, 1]} : vector<128x128xf32> to vector<8x128xf32>
    %25 = arith.addf %23, %24 : vector<8x128xf32>
    %26 = vector.extract_strided_slice %22 {offsets = [8, 0], sizes = [8, 128], strides = [1, 1]} : vector<128x128xf32> to vector<8x128xf32>
    %27 = arith.addf %25, %26 : vector<8x128xf32>
    %28 = vector.extract_strided_slice %22 {offsets = [16, 0], sizes = [8, 128], strides = [1, 1]} : vector<128x128xf32> to vector<8x128xf32>
    %29 = arith.addf %27, %28 : vector<8x128xf32>
    %30 = vector.extract_strided_slice %22 {offsets = [24, 0], sizes = [8, 128], strides = [1, 1]} : vector<128x128xf32> to vector<8x128xf32>
    %31 = arith.addf %29, %30 : vector<8x128xf32>
    %32 = vector.extract_strided_slice %22 {offsets = [32, 0], sizes = [8, 128], strides = [1, 1]} : vector<128x128xf32> to vector<8x128xf32>
    %33 = arith.addf %31, %32 : vector<8x128xf32>
    %34 = vector.extract_strided_slice %22 {offsets = [40, 0], sizes = [8, 128], strides = [1, 1]} : vector<128x128xf32> to vector<8x128xf32>
    %35 = arith.addf %33, %34 : vector<8x128xf32>
    %36 = vector.extract_strided_slice %22 {offsets = [48, 0], sizes = [8, 128], strides = [1, 1]} : vector<128x128xf32> to vector<8x128xf32>
    %37 = arith.addf %35, %36 : vector<8x128xf32>
    %38 = vector.extract_strided_slice %22 {offsets = [56, 0], sizes = [8, 128], strides = [1, 1]} : vector<128x128xf32> to vector<8x128xf32>
    %39 = arith.addf %37, %38 : vector<8x128xf32>
    %40 = vector.extract_strided_slice %22 {offsets = [64, 0], sizes = [8, 128], strides = [1, 1]} : vector<128x128xf32> to vector<8x128xf32>
    %41 = arith.addf %39, %40 : vector<8x128xf32>
    %42 = vector.extract_strided_slice %22 {offsets = [72, 0], sizes = [8, 128], strides = [1, 1]} : vector<128x128xf32> to vector<8x128xf32>
    %43 = arith.addf %41, %42 : vector<8x128xf32>
    %44 = vector.extract_strided_slice %22 {offsets = [80, 0], sizes = [8, 128], strides = [1, 1]} : vector<128x128xf32> to vector<8x128xf32>
    %45 = arith.addf %43, %44 : vector<8x128xf32>
    %46 = vector.extract_strided_slice %22 {offsets = [88, 0], sizes = [8, 128], strides = [1, 1]} : vector<128x128xf32> to vector<8x128xf32>
    %47 = arith.addf %45, %46 : vector<8x128xf32>
    %48 = vector.extract_strided_slice %22 {offsets = [96, 0], sizes = [8, 128], strides = [1, 1]} : vector<128x128xf32> to vector<8x128xf32>
    %49 = arith.addf %47, %48 : vector<8x128xf32>
    %50 = vector.extract_strided_slice %22 {offsets = [104, 0], sizes = [8, 128], strides = [1, 1]} : vector<128x128xf32> to vector<8x128xf32>
    %51 = arith.addf %49, %50 : vector<8x128xf32>
    %52 = vector.extract_strided_slice %22 {offsets = [112, 0], sizes = [8, 128], strides = [1, 1]} : vector<128x128xf32> to vector<8x128xf32>
    %53 = arith.addf %51, %52 : vector<8x128xf32>
    %54 = vector.extract_strided_slice %22 {offsets = [120, 0], sizes = [8, 128], strides = [1, 1]} : vector<128x128xf32> to vector<8x128xf32>
    %55 = arith.addf %53, %54 : vector<8x128xf32>
    %c0_7 = arith.constant 0 : index
    %c0_8 = arith.constant 0 : index
    %56 = vector.load %arg4[%c0_7, %c0_8] : memref<8x128xf32, #tpu.memory_space<vmem>>, vector<8x128xf32>
    tpu.vector_store %arg4[%c0_7, %c0_8], %55 {strides = array<i32>} : memref<8x128xf32, #tpu.memory_space<vmem>>, vector<8x128xf32>,
    return
  }
  func.func @transform_0(%arg0: i32, %arg1: i32) -> (i32, i32) {
    %c0_i32 = arith.constant 0 : i32
    return %arg0, %arg1 : i32, i32
  }
  func.func @transform_1(%arg0: i32, %arg1: i32) -> (i32, i32) {
    %c0_i32 = arith.constant 0 : i32
    return %arg1, %arg0 : i32, i32
  }
  func.func @transform_2(%arg0: i32, %arg1: i32) -> (i32, i32) {
    %c0_i32 = arith.constant 0 : i32
    return %arg0, %arg1 : i32, i32
  }
}

</mosaic_0001>

<llo_original>
// kernel: tpu_custom_call.1
$region0: #{tpu_custom_call.1}
  #allocation0 [shape = 'u32[]', space=smem, size = 0x4, offset = 0x4, fixed_abs, tag = 'smem constant byte address 0x4 - core index']
  #allocation1 [shape = 'u32[72,128]{1,0:T(1,128)}', space=vmem, size = 0x9000, scoped, tag = 'internal scratch']
  %s0 = inlined_call_operand.vmem [shape: f32[200,384], index: 0, kind: input, shape index: {}]
  %s1 = inlined_call_operand.vmem [shape: f32[384,200], index: 1, kind: input, shape index: {}]
  %s2 = inlined_call_operand.hbm [shape: f32[16,384], index: 2, kind: output, shape index: {}]
  %s3 = sld [smem:[#allocation0]]
  $region131: #{tpu_custom_call.1} parent=0
    _
  %s5 = ssub.s32 1, %s3
  %s6 = scalar_select 0, %s5, %s3
  $region1: #{tpu_custom_call.1} parent=0
    #allocation2 [shape = 'u8[131072]{0}', space=vmem, size = 0x20000, scoped, tag = 'input window, operand 0']
    #allocation3 [shape = 'u8[131072]{0}', space=vmem, size = 0x20000, scoped, tag = 'input window, operand 1']
    #allocation4 [shape = 'u8[8192]{0}', space=vmem, size = 0x2000, scoped, tag = 'output window, operand 0']
    #allocation5 [shape = 's32[2]{0}', space=sflag, size = 0x8, scoped, tag = 'scoped memory for tpu_custom_call.1']
    %7 = vsyncpa [#allocation5], 0
    %s8 = scalar_lea.sflag [#allocation5], 1
    %9 = vsyncpa %s8, 0
    loop: start=0, step=1, limit=8
    $region2: #{tpu_custom_call.1} parent=1 // loop_pre_header
      _
    $region3: #{tpu_custom_call.1} parent=1 // loop_header
      %s11 = sphi 0, %s15
      %p12 = scmp.ge.s32.totalorder %s11, 8
      %s18 = sphi 0, %s30
      %s19 = sphi 0, %s26
      %s20 = sphi 0, %s18
      %s21 = sphi 0, %s19
      %s22 = sphi 0, %s20
      %s23 = sphi 0, %s21
      %s35 = sphi 0, %s37
      %s38 = sphi 0, %s35
      %s39 = sphi 0, %s38
      %s55 = sphi 0, %s39
      %s63 = sphi 0, %s65
      %s66 = sphi 0, %s63
      %s67 = sphi 0, %s66
      %s83 = sphi 0, %s67
      %s91 = sphi 0, %s93
      %s94 = sphi 0, %s91
      %s95 = sphi 0, %s94
      %s111 = sphi 0, %s95
    $region4: #{tpu_custom_call.1} parent=1 // loop_header_branch
      %14 = sbr.rel (%p12) target = $region8
    $region5: #{tpu_custom_call.1} parent=1 // loop_body
      %s16 = ssub.s32 %s11, 1
      %s17 = ssub.s32 %s11, 2
      %s24 = sadd.s32 1, %s19
      %p25 = scmp.ge.s32.totalorder %s24, 3
      %s26 = scalar_select %p25, 0, %s24
      %s27 = sadd.s32 1, %s18
      %s28 = scalar_select %p25, %s27, %s18
      %p29 = scmp.ge.s32.totalorder %s28, 2
      %s30 = scalar_select %p29, 0, %s28
      %s31 = ssub.s32 %s18, %s30
      %s32 = ssub.s32 %s19, %s26
      %s33 = sor.u32 %s31, %s32
      %p34 = scmp.eq.s32.totalorder %s33, 0
      %s36 = sadd.s32 %s35, 1
      %s37 = scalar_select %p34, %s35, %s36
      %p40 = pneg %p34
      %p41 = scmp.eq.s32.totalorder %s11, 5
      %p42 = por %p40, %p41
      %p43 = scmp.ne.s32.totalorder %s35, %s38
      %p44 = scmp.eq.s32.totalorder %s11, 0
      %p45 = por %p43, %p44
      %p46 = scmp.ne.s32.totalorder %s35, %s38
      %p47 = scmp.eq.s32.totalorder %s16, 5
      %p48 = por %p46, %p47
      %p49 = scmp.ne.s32.totalorder %s38, %s39
      %p50 = scmp.eq.s32.totalorder %s16, 0
      %p51 = por %p49, %p50
      %p52 = scmp.ne.s32.totalorder %s38, %s39
      %p53 = scmp.eq.s32.totalorder %s17, 5
      %p54 = por %p52, %p53
      %p56 = scmp.ne.s32.totalorder %s39, %s55
      %p57 = scmp.eq.s32.totalorder %s17, 0
      %p58 = por %p56, %p57
      %s59 = ssub.s32 %s19, %s26
      %s60 = ssub.s32 %s18, %s30
      %s61 = sor.u32 %s59, %s60
      %p62 = scmp.eq.s32.totalorder %s61, 0
      %s64 = sadd.s32 %s63, 1
      %s65 = scalar_select %p62, %s63, %s64
      %p68 = pneg %p62
      %p69 = scmp.eq.s32.totalorder %s11, 5
      %p70 = por %p68, %p69
      %p71 = scmp.ne.s32.totalorder %s63, %s66
      %p72 = scmp.eq.s32.totalorder %s11, 0
      %p73 = por %p71, %p72
      %p74 = scmp.ne.s32.totalorder %s63, %s66
      %p75 = scmp.eq.s32.totalorder %s16, 5
      %p76 = por %p74, %p75
      %p77 = scmp.ne.s32.totalorder %s66, %s67
      %p78 = scmp.eq.s32.totalorder %s16, 0
      %p79 = por %p77, %p78
      %p80 = scmp.ne.s32.totalorder %s66, %s67
      %p81 = scmp.eq.s32.totalorder %s17, 5
      %p82 = por %p80, %p81
      %p84 = scmp.ne.s32.totalorder %s67, %s83
      %p85 = scmp.eq.s32.totalorder %s17, 0
      %p86 = por %p84, %p85
      %s87 = ssub.s32 %s18, %s30
      %s88 = ssub.s32 %s19, %s26
      %s89 = sor.u32 %s87, %s88
      %p90 = scmp.eq.s32.totalorder %s89, 0
      %s92 = sadd.s32 %s91, 1
      %s93 = scalar_select %p90, %s91, %s92
      %p96 = pneg %p90
      %p97 = scmp.eq.s32.totalorder %s11, 5
      %p98 = por %p96, %p97
      %p99 = scmp.ne.s32.totalorder %s91, %s94
      %p100 = scmp.eq.s32.totalorder %s11, 0
      %p101 = por %p99, %p100
      %p102 = scmp.ne.s32.totalorder %s91, %s94
      %p103 = scmp.eq.s32.totalorder %s16, 5
      %p104 = por %p102, %p103
      %p105 = scmp.ne.s32.totalorder %s94, %s95
      %p106 = scmp.eq.s32.totalorder %s16, 0
      %p107 = por %p105, %p106
      %p108 = scmp.ne.s32.totalorder %s94, %s95
      %p109 = scmp.eq.s32.totalorder %s17, 5
      %p110 = por %p108, %p109
      %p112 = scmp.ne.s32.totalorder %s95, %s111
      %p113 = scmp.eq.s32.totalorder %s17, 0
      %p114 = por %p112, %p113
      %p115 = scmp.le.s32.totalorder 1, %s11
      %p116 = scmp.lt.s32.totalorder %s11, 7
      %p117 = pnand %p115, %p116
      %p118 = pneg %p117
      // Predicated region
      $region9: #{tpu_custom_call.1} parent=5 // pred_check
        _
      $region10: #{tpu_custom_call.1} parent=5 // pred_check_branch
        %120 = sbr.rel (%p117) target = $region12
      $region11: #{tpu_custom_call.1} parent=5 // pred_region
        %s121 = ssub.s32 %s11, 1
      $region12: #{tpu_custom_call.1} parent=5 // pred_fallthru
        _
      %p122 = scmp.lt.s32.totalorder %s11, 6
      // Predicated region
      $region13: #{tpu_custom_call.1} parent=5 // pred_check
        %p123 = pneg %p122
      $region14: #{tpu_custom_call.1} parent=5 // pred_check_branch
        %125 = sbr.rel (%p123) target = $region16
      $region15: #{tpu_custom_call.1} parent=5 // pred_region
        // Predicated region
        $region17: #{tpu_custom_call.1} parent=15 // pred_check
          %p126 = pneg %p45
        $region18: #{tpu_custom_call.1} parent=15 // pred_check_branch
          %128 = sbr.rel (%p126) target = $region20
        $region19: #{tpu_custom_call.1} parent=15 // pred_region
          %s129 = sand.u32 %s35, 1
          %s130 = sand.u32 %s35, 1
          %s131 = smul.addr %s130, 128
          %s132 = scalar_lea.vmem [#allocation2], %s131
          %s133 = smul.u32 16, %s18
          %s134 = ssub.s32 25, %s133
          %p135 = scmp.lt.s32.totalorder %s134, 16
          %s136 = scalar_select %p135, %s134, 16
          %s137 = smul.u32 8, %s136
          %p138 = scmp.ne.s32.totalorder 0, %s137
          %s139 = smul.addr %s133, 3
          %s140 = sadd.s32 %s19, %s139
          %s141 = smul.addr %s140, 8
          %s142 = scalar_lea.vmem %s0, %s141
          // Predicated region
          $region21: #{tpu_custom_call.1} parent=19 // pred_check
            %p143 = pneg %p138
          $region22: #{tpu_custom_call.1} parent=19 // pred_check_branch
            %145 = sbr.rel (%p143) target = $region24
          $region23: #{tpu_custom_call.1} parent=19 // pred_region
            // Predicated region
            $region25: #{tpu_custom_call.1} parent=23 // pred_check
              _
            $region26: #{tpu_custom_call.1} parent=23 // pred_check_branch
              %147 = sbr.rel (0) target = $region28
            $region27: #{tpu_custom_call.1} parent=23 // pred_region
              // Predicated region
              $region47: #{tpu_custom_call.1} parent=27 // pred_check
                _
              $region48: #{tpu_custom_call.1} parent=27 // pred_check_branch
                %227 = sbr.rel (0) target = $region50
              $region49: #{tpu_custom_call.1} parent=27 // pred_region
                %s228 = sshrl.u32 %s136, 4
                // While loop
                $region51: #{tpu_custom_call.1} parent=49 // loop_pre_header
                  _
                $region52: #{tpu_custom_call.1} parent=49 // loop_header
                  %s230 = sphi 0, %s232
                  %p231 = scmp.ge.s32.totalorder %s230, %s228
                  %s235 = sphi 0, %s272
                  %s236 = sphi %s142, %s275
                  %s237 = sphi %s132, %s276
                $region53: #{tpu_custom_call.1} parent=49 // loop_header_branch
                  %234 = sbr.rel (%p231) target = $region57
                $region54: #{tpu_custom_call.1} parent=49 // loop_body
                  %v238 = vld [vmem:[%s236] sm:$0xff]
                  %239 = vst [vmem:[%s237] sm:$0xff] %v238
                  %v240 = vld [vmem:[%s236 + $0x18] sm:$0xff]
                  %241 = vst [vmem:[%s237 + $0x8] sm:$0xff] %v240
                  %v242 = vld [vmem:[%s236 + $0x30] sm:$0xff]
                  %243 = vst [vmem:[%s237 + $0x10] sm:$0xff] %v242
                  %v244 = vld [vmem:[%s236 + $0x48] sm:$0xff]
                  %245 = vst [vmem:[%s237 + $0x18] sm:$0xff] %v244
                  %v246 = vld [vmem:[%s236 + $0x60] sm:$0xff]
                  %247 = vst [vmem:[%s237 + $0x20] sm:$0xff] %v246
                  %v248 = vld [vmem:[%s236 + $0x78] sm:$0xff]
                  %249 = vst [vmem:[%s237 + $0x28] sm:$0xff] %v248
                  %v250 = vld [vmem:[%s236 + $0x90] sm:$0xff]
                  %251 = vst [vmem:[%s237 + $0x30] sm:$0xff] %v250
                  %v252 = vld [vmem:[%s236 + $0xa8] sm:$0xff]
                  %253 = vst [vmem:[%s237 + $0x38] sm:$0xff] %v252
                  %v254 = vld [vmem:[%s236 + $0xc0] sm:$0xff]
                  %255 = vst [vmem:[%s237 + $0x40] sm:$0xff] %v254
                  %v256 = vld [vmem:[%s236 + $0xd8] sm:$0xff]
                  %257 = vst [vmem:[%s237 + $0x48] sm:$0xff] %v256
                  %v258 = vld [vmem:[%s236 + $0xf0] sm:$0xff]
                  %259 = vst [vmem:[%s237 + $0x50] sm:$0xff] %v258
                  %v260 = vld [vmem:[%s236 + $0x108] sm:$0xff]
                  %261 = vst [vmem:[%s237 + $0x58] sm:$0xff] %v260
                  %v262 = vld [vmem:[%s236 + $0x120] sm:$0xff]
                  %263 = vst [vmem:[%s237 + $0x60] sm:$0xff] %v262
                  %v264 = vld [vmem:[%s236 + $0x138] sm:$0xff]
                  %265 = vst [vmem:[%s237 + $0x68] sm:$0xff] %v264
                  %v266 = vld [vmem:[%s236 + $0x150] sm:$0xff]
                  %267 = vst [vmem:[%s237 + $0x70] sm:$0xff] %v266
                  %v268 = vld [vmem:[%s236 + $0x168] sm:$0xff]
                  %269 = vst [vmem:[%s237 + $0x78] sm:$0xff] %v268
                  %s270 = sadd.s32 1, %s235
                  %p271 = scmp.ge.s32.totalorder %s270, %s228
                  %s272 = scalar_select %p271, 0, %s270
                  %s273 = smul.u32 %s272, 384
                  %s274 = smul.u32 %s272, 128
                  %s275 = scalar_lea.vmem %s142, %s273
                  %s276 = scalar_lea.vmem %s132, %s274 [#allocation2]
                $region55: #{tpu_custom_call.1} parent=49 // loop_footer
                  %s232 = sadd.s32 %s230, 1
                $region56: #{tpu_custom_call.1} parent=49 // loop_footer_branch
                  %229 = sbr.rel target = $region52
                $region57: #{tpu_custom_call.1} parent=49 // loop_exit
                  _
                %s277 = sshrl.u32 %s136, 4
                %s278 = sand.u32 %s136, 15
                %s279 = smul.u32 %s277, 16
                %s280 = smul.u32 24, %s279
                %s281 = scalar_lea.vmem %s142, %s280
                %s282 = smul.u32 8, %s279
                %s283 = scalar_lea.vmem %s132, %s282 [#allocation2]
                // While loop
                $region58: #{tpu_custom_call.1} parent=49 // loop_pre_header
                  _
                $region59: #{tpu_custom_call.1} parent=49 // loop_header
                  %s285 = sphi 0, %s287
                  %p286 = scmp.ge.s32.totalorder %s285, %s278
                  %s290 = sphi 0, %s297
                  %s291 = sphi %s281, %s300
                  %s292 = sphi %s283, %s301
                $region60: #{tpu_custom_call.1} parent=49 // loop_header_branch
                  %289 = sbr.rel (%p286) target = $region64
                $region61: #{tpu_custom_call.1} parent=49 // loop_body
                  %v293 = vld [vmem:[%s291] sm:$0xff]
                  %294 = vst [vmem:[%s292] sm:$0xff] %v293
                  %s295 = sadd.s32 1, %s290
                  %p296 = scmp.ge.s32.totalorder %s295, %s278
                  %s297 = scalar_select %p296, 0, %s295
                  %s298 = smul.u32 %s297, 24
                  %s299 = smul.u32 %s297, 8
                  %s300 = scalar_lea.vmem %s281, %s298
                  %s301 = scalar_lea.vmem %s283, %s299 [#allocation2]
                $region62: #{tpu_custom_call.1} parent=49 // loop_footer
                  %s287 = sadd.s32 %s285, 1
                $region63: #{tpu_custom_call.1} parent=49 // loop_footer_branch
                  %284 = sbr.rel target = $region59
                $region64: #{tpu_custom_call.1} parent=49 // loop_exit
                  _
              $region50: #{tpu_custom_call.1} parent=27 // pred_fallthru
                _
              // Predicated region
              $region65: #{tpu_custom_call.1} parent=27 // pred_check
                _
              $region66: #{tpu_custom_call.1} parent=27 // pred_check_branch
                %303 = sbr.rel target = $region68
              $region67: #{tpu_custom_call.1} parent=27 // pred_region
                _
              $region68: #{tpu_custom_call.1} parent=27 // pred_fallthru
                _
            $region28: #{tpu_custom_call.1} parent=23 // pred_fallthru
              _
            // Predicated region
            $region29: #{tpu_custom_call.1} parent=23 // pred_check
              _
            $region30: #{tpu_custom_call.1} parent=23 // pred_check_branch
              %149 = sbr.rel target = $region32
            $region31: #{tpu_custom_call.1} parent=23 // pred_region
              %s151 = ssub.s32 256, 1
              %s152 = sshrl.u32 %s136, 4
              // While loop
              $region33: #{tpu_custom_call.1} parent=31 // loop_pre_header
                _
              $region34: #{tpu_custom_call.1} parent=31 // loop_header
                %s154 = sphi 0, %s156
                %p155 = scmp.ge.s32.totalorder %s154, %s152
                %s159 = sphi 0, %s196
                %s160 = sphi %s142, %s199
                %s161 = sphi %s132, %s200
              $region35: #{tpu_custom_call.1} parent=31 // loop_header_branch
                %158 = sbr.rel (%p155) target = $region39
              $region36: #{tpu_custom_call.1} parent=31 // loop_body
                %v162 = vld [vmem:[%s160] sm:%s151]
                %163 = vst [vmem:[%s161] sm:%s151] %v162
                %v164 = vld [vmem:[%s160 + $0x18] sm:%s151]
                %165 = vst [vmem:[%s161 + $0x8] sm:%s151] %v164
                %v166 = vld [vmem:[%s160 + $0x30] sm:%s151]
                %167 = vst [vmem:[%s161 + $0x10] sm:%s151] %v166
                %v168 = vld [vmem:[%s160 + $0x48] sm:%s151]
                %169 = vst [vmem:[%s161 + $0x18] sm:%s151] %v168
                %v170 = vld [vmem:[%s160 + $0x60] sm:%s151]
                %171 = vst [vmem:[%s161 + $0x20] sm:%s151] %v170
                %v172 = vld [vmem:[%s160 + $0x78] sm:%s151]
                %173 = vst [vmem:[%s161 + $0x28] sm:%s151] %v172
                %v174 = vld [vmem:[%s160 + $0x90] sm:%s151]
                %175 = vst [vmem:[%s161 + $0x30] sm:%s151] %v174
                %v176 = vld [vmem:[%s160 + $0xa8] sm:%s151]
                %177 = vst [vmem:[%s161 + $0x38] sm:%s151] %v176
                %v178 = vld [vmem:[%s160 + $0xc0] sm:%s151]
                %179 = vst [vmem:[%s161 + $0x40] sm:%s151] %v178
                %v180 = vld [vmem:[%s160 + $0xd8] sm:%s151]
                %181 = vst [vmem:[%s161 + $0x48] sm:%s151] %v180
                %v182 = vld [vmem:[%s160 + $0xf0] sm:%s151]
                %183 = vst [vmem:[%s161 + $0x50] sm:%s151] %v182
                %v184 = vld [vmem:[%s160 + $0x108] sm:%s151]
                %185 = vst [vmem:[%s161 + $0x58] sm:%s151] %v184
                %v186 = vld [vmem:[%s160 + $0x120] sm:%s151]
                %187 = vst [vmem:[%s161 + $0x60] sm:%s151] %v186
                %v188 = vld [vmem:[%s160 + $0x138] sm:%s151]
                %189 = vst [vmem:[%s161 + $0x68] sm:%s151] %v188
                %v190 = vld [vmem:[%s160 + $0x150] sm:%s151]
                %191 = vst [vmem:[%s161 + $0x70] sm:%s151] %v190
                %v192 = vld [vmem:[%s160 + $0x168] sm:%s151]
                %193 = vst [vmem:[%s161 + $0x78] sm:%s151] %v192
                %s194 = sadd.s32 1, %s159
                %p195 = scmp.ge.s32.totalorder %s194, %s152
                %s196 = scalar_select %p195, 0, %s194
                %s197 = smul.u32 %s196, 384
                %s198 = smul.u32 %s196, 128
                %s199 = scalar_lea.vmem %s142, %s197
                %s200 = scalar_lea.vmem %s132, %s198 [#allocation2]
              $region37: #{tpu_custom_call.1} parent=31 // loop_footer
                %s156 = sadd.s32 %s154, 1
              $region38: #{tpu_custom_call.1} parent=31 // loop_footer_branch
                %153 = sbr.rel target = $region34
              $region39: #{tpu_custom_call.1} parent=31 // loop_exit
                _
              %s201 = sshrl.u32 %s136, 4
              %s202 = sand.u32 %s136, 15
              %s203 = smul.u32 %s201, 16
              %s204 = smul.u32 24, %s203
              %s205 = scalar_lea.vmem %s142, %s204
              %s206 = smul.u32 8, %s203
              %s207 = scalar_lea.vmem %s132, %s206 [#allocation2]
              // While loop
              $region40: #{tpu_custom_call.1} parent=31 // loop_pre_header
                _
              $region41: #{tpu_custom_call.1} parent=31 // loop_header
                %s209 = sphi 0, %s211
                %p210 = scmp.ge.s32.totalorder %s209, %s202
                %s214 = sphi 0, %s221
                %s215 = sphi %s205, %s224
                %s216 = sphi %s207, %s225
              $region42: #{tpu_custom_call.1} parent=31 // loop_header_branch
                %213 = sbr.rel (%p210) target = $region46
              $region43: #{tpu_custom_call.1} parent=31 // loop_body
                %v217 = vld [vmem:[%s215] sm:%s151]
                %218 = vst [vmem:[%s216] sm:%s151] %v217
                %s219 = sadd.s32 1, %s214
                %p220 = scmp.ge.s32.totalorder %s219, %s202
                %s221 = scalar_select %p220, 0, %s219
                %s222 = smul.u32 %s221, 24
                %s223 = smul.u32 %s221, 8
                %s224 = scalar_lea.vmem %s205, %s222
                %s225 = scalar_lea.vmem %s207, %s223 [#allocation2]
              $region44: #{tpu_custom_call.1} parent=31 // loop_footer
                %s211 = sadd.s32 %s209, 1
              $region45: #{tpu_custom_call.1} parent=31 // loop_footer_branch
                %208 = sbr.rel target = $region41
              $region46: #{tpu_custom_call.1} parent=31 // loop_exit
                _
            $region32: #{tpu_custom_call.1} parent=23 // pred_fallthru
              _
          $region24: #{tpu_custom_call.1} parent=19 // pred_fallthru
            _
          %304 = vnop
        $region20: #{tpu_custom_call.1} parent=15 // pred_fallthru
          _
        // Predicated region
        $region69: #{tpu_custom_call.1} parent=15 // pred_check
          %p305 = pneg %p73
        $region70: #{tpu_custom_call.1} parent=15 // pred_check_branch
          %307 = sbr.rel (%p305) target = $region72
        $region71: #{tpu_custom_call.1} parent=15 // pred_region
          %s308 = sand.u32 %s63, 1
          %s309 = sand.u32 %s63, 1
          %s310 = smul.addr %s309, 128
          %s311 = scalar_lea.vmem [#allocation3], %s310
          %s312 = smul.u32 16, %s19
          %s313 = smul.addr %s312, 2
          %s314 = sadd.s32 %s18, %s313
          %s315 = smul.addr %s314, 8
          %s316 = scalar_lea.vmem %s1, %s315
          // Predicated region
          $region73: #{tpu_custom_call.1} parent=71 // pred_check
            _
          $region74: #{tpu_custom_call.1} parent=71 // pred_check_branch
            %318 = sbr.rel (0) target = $region76
          $region75: #{tpu_custom_call.1} parent=71 // pred_region
            // Predicated region
            $region77: #{tpu_custom_call.1} parent=75 // pred_check
              _
            $region78: #{tpu_custom_call.1} parent=75 // pred_check_branch
              %320 = sbr.rel (0) target = $region80
            $region79: #{tpu_custom_call.1} parent=75 // pred_region
              // Predicated region
              $region92: #{tpu_custom_call.1} parent=79 // pred_check
                _
              $region93: #{tpu_custom_call.1} parent=79 // pred_check_branch
                %366 = sbr.rel (0) target = $region95
              $region94: #{tpu_custom_call.1} parent=79 // pred_region
                loop: start=0, step=1, limit=1
                $region96: #{tpu_custom_call.1} parent=94 // loop_pre_header
                  _
                $region97: #{tpu_custom_call.1} parent=94 // loop_header
                  %s368 = sphi 0, %s372
                  %p369 = scmp.ge.s32.totalorder %s368, 1
                  %s373 = sphi %s316, %s316
                  %s374 = sphi %s311, %s311
                $region98: #{tpu_custom_call.1} parent=94 // loop_header_branch
                  %371 = sbr.rel (%p369) target = $region102
                $region99: #{tpu_custom_call.1} parent=94 // loop_body
                  %v375 = vld [vmem:[%s373] sm:$0xff]
                  %376 = vst [vmem:[%s374] sm:$0xff] %v375
                  %v377 = vld [vmem:[%s373 + $0x10] sm:$0xff]
                  %378 = vst [vmem:[%s374 + $0x8] sm:$0xff] %v377
                  %v379 = vld [vmem:[%s373 + $0x20] sm:$0xff]
                  %380 = vst [vmem:[%s374 + $0x10] sm:$0xff] %v379
                  %v381 = vld [vmem:[%s373 + $0x30] sm:$0xff]
                  %382 = vst [vmem:[%s374 + $0x18] sm:$0xff] %v381
                  %v383 = vld [vmem:[%s373 + $0x40] sm:$0xff]
                  %384 = vst [vmem:[%s374 + $0x20] sm:$0xff] %v383
                  %v385 = vld [vmem:[%s373 + $0x50] sm:$0xff]
                  %386 = vst [vmem:[%s374 + $0x28] sm:$0xff] %v385
                  %v387 = vld [vmem:[%s373 + $0x60] sm:$0xff]
                  %388 = vst [vmem:[%s374 + $0x30] sm:$0xff] %v387
                  %v389 = vld [vmem:[%s373 + $0x70] sm:$0xff]
                  %390 = vst [vmem:[%s374 + $0x38] sm:$0xff] %v389
                  %v391 = vld [vmem:[%s373 + $0x80] sm:$0xff]
                  %392 = vst [vmem:[%s374 + $0x40] sm:$0xff] %v391
                  %v393 = vld [vmem:[%s373 + $0x90] sm:$0xff]
                  %394 = vst [vmem:[%s374 + $0x48] sm:$0xff] %v393
                  %v395 = vld [vmem:[%s373 + $0xa0] sm:$0xff]
                  %396 = vst [vmem:[%s374 + $0x50] sm:$0xff] %v395
                  %v397 = vld [vmem:[%s373 + $0xb0] sm:$0xff]
                  %398 = vst [vmem:[%s374 + $0x58] sm:$0xff] %v397
                  %v399 = vld [vmem:[%s373 + $0xc0] sm:$0xff]
                  %400 = vst [vmem:[%s374 + $0x60] sm:$0xff] %v399
                  %v401 = vld [vmem:[%s373 + $0xd0] sm:$0xff]
                  %402 = vst [vmem:[%s374 + $0x68] sm:$0xff] %v401
                  %v403 = vld [vmem:[%s373 + $0xe0] sm:$0xff]
                  %404 = vst [vmem:[%s374 + $0x70] sm:$0xff] %v403
                  %v405 = vld [vmem:[%s373 + $0xf0] sm:$0xff]
                  %406 = vst [vmem:[%s374 + $0x78] sm:$0xff] %v405
                $region100: #{tpu_custom_call.1} parent=94 // loop_footer
                  %s372 = sadd.s32 1, %s368
                $region101: #{tpu_custom_call.1} parent=94 // loop_footer_branch
                  %367 = sbr.rel target = $region97
                $region102: #{tpu_custom_call.1} parent=94 // loop_exit
                  _
              $region95: #{tpu_custom_call.1} parent=79 // pred_fallthru
                _
              // Predicated region
              $region103: #{tpu_custom_call.1} parent=79 // pred_check
                _
              $region104: #{tpu_custom_call.1} parent=79 // pred_check_branch
                %408 = sbr.rel target = $region106
              $region105: #{tpu_custom_call.1} parent=79 // pred_region
                _
              $region106: #{tpu_custom_call.1} parent=79 // pred_fallthru
                _
            $region80: #{tpu_custom_call.1} parent=75 // pred_fallthru
              _
            // Predicated region
            $region81: #{tpu_custom_call.1} parent=75 // pred_check
              _
            $region82: #{tpu_custom_call.1} parent=75 // pred_check_branch
              %322 = sbr.rel target = $region84
            $region83: #{tpu_custom_call.1} parent=75 // pred_region
              %s324 = ssub.s32 256, 1
              loop: start=0, step=1, limit=1
              $region85: #{tpu_custom_call.1} parent=83 // loop_pre_header
                _
              $region86: #{tpu_custom_call.1} parent=83 // loop_header
                %s326 = sphi 0, %s330
                %p327 = scmp.ge.s32.totalorder %s326, 1
                %s331 = sphi %s316, %s316
                %s332 = sphi %s311, %s311
              $region87: #{tpu_custom_call.1} parent=83 // loop_header_branch
                %329 = sbr.rel (%p327) target = $region91
              $region88: #{tpu_custom_call.1} parent=83 // loop_body
                %v333 = vld [vmem:[%s331] sm:%s324]
                %334 = vst [vmem:[%s332] sm:%s324] %v333
                %v335 = vld [vmem:[%s331 + $0x10] sm:%s324]
                %336 = vst [vmem:[%s332 + $0x8] sm:%s324] %v335
                %v337 = vld [vmem:[%s331 + $0x20] sm:%s324]
                %338 = vst [vmem:[%s332 + $0x10] sm:%s324] %v337
                %v339 = vld [vmem:[%s331 + $0x30] sm:%s324]
                %340 = vst [vmem:[%s332 + $0x18] sm:%s324] %v339
                %v341 = vld [vmem:[%s331 + $0x40] sm:%s324]
                %342 = vst [vmem:[%s332 + $0x20] sm:%s324] %v341
                %v343 = vld [vmem:[%s331 + $0x50] sm:%s324]
                %344 = vst [vmem:[%s332 + $0x28] sm:%s324] %v343
                %v345 = vld [vmem:[%s331 + $0x60] sm:%s324]
                %346 = vst [vmem:[%s332 + $0x30] sm:%s324] %v345
                %v347 = vld [vmem:[%s331 + $0x70] sm:%s324]
                %348 = vst [vmem:[%s332 + $0x38] sm:%s324] %v347
                %v349 = vld [vmem:[%s331 + $0x80] sm:%s324]
                %350 = vst [vmem:[%s332 + $0x40] sm:%s324] %v349
                %v351 = vld [vmem:[%s331 + $0x90] sm:%s324]
                %352 = vst [vmem:[%s332 + $0x48] sm:%s324] %v351
                %v353 = vld [vmem:[%s331 + $0xa0] sm:%s324]
                %354 = vst [vmem:[%s332 + $0x50] sm:%s324] %v353
                %v355 = vld [vmem:[%s331 + $0xb0] sm:%s324]
                %356 = vst [vmem:[%s332 + $0x58] sm:%s324] %v355
                %v357 = vld [vmem:[%s331 + $0xc0] sm:%s324]
                %358 = vst [vmem:[%s332 + $0x60] sm:%s324] %v357
                %v359 = vld [vmem:[%s331 + $0xd0] sm:%s324]
                %360 = vst [vmem:[%s332 + $0x68] sm:%s324] %v359
                %v361 = vld [vmem:[%s331 + $0xe0] sm:%s324]
                %362 = vst [vmem:[%s332 + $0x70] sm:%s324] %v361
                %v363 = vld [vmem:[%s331 + $0xf0] sm:%s324]
                %364 = vst [vmem:[%s332 + $0x78] sm:%s324] %v363
              $region89: #{tpu_custom_call.1} parent=83 // loop_footer
                %s330 = sadd.s32 1, %s326
              $region90: #{tpu_custom_call.1} parent=83 // loop_footer_branch
                %325 = sbr.rel target = $region86
              $region91: #{tpu_custom_call.1} parent=83 // loop_exit
                _
            $region84: #{tpu_custom_call.1} parent=75 // pred_fallthru
              _
          $region76: #{tpu_custom_call.1} parent=71 // pred_fallthru
            _
          %409 = vnop
        $region72: #{tpu_custom_call.1} parent=15 // pred_fallthru
          _
      $region16: #{tpu_custom_call.1} parent=5 // pred_fallthru
        _
      %p410 = scmp.le.s32.totalorder 1, %s11
      %p411 = scmp.lt.s32.totalorder %s11, 7
      %p412 = pnand %p410, %p411
      %p413 = pneg %p412
      // Predicated region
      $region107: #{tpu_custom_call.1} parent=5 // pred_check
        _
      $region108: #{tpu_custom_call.1} parent=5 // pred_check_branch
        %415 = sbr.rel (%p412) target = $region110
      $region109: #{tpu_custom_call.1} parent=5 // pred_region
        %s416 = ssub.s32 %s11, 1
        %s417 = sand.u32 %s38, 1
        %s418 = sand.u32 %s38, 1
        %s419 = smul.addr %s418, 128
        %s420 = scalar_lea.vmem [#allocation2], %s419
        // Predicated region
        $region111: #{tpu_custom_call.1} parent=109 // pred_check
          %p421 = pneg %p51
        $region112: #{tpu_custom_call.1} parent=109 // pred_check_branch
          %423 = sbr.rel (%p421) target = $region114
        $region113: #{tpu_custom_call.1} parent=109 // pred_region
          _
        $region114: #{tpu_custom_call.1} parent=109 // pred_fallthru
          _
        %s424 = sand.u32 %s66, 1
        %s425 = sand.u32 %s66, 1
        %s426 = smul.addr %s425, 128
        %s427 = scalar_lea.vmem [#allocation3], %s426
        // Predicated region
        $region115: #{tpu_custom_call.1} parent=109 // pred_check
          %p428 = pneg %p79
        $region116: #{tpu_custom_call.1} parent=109 // pred_check_branch
          %430 = sbr.rel (%p428) target = $region118
        $region117: #{tpu_custom_call.1} parent=109 // pred_region
          _
        $region118: #{tpu_custom_call.1} parent=109 // pred_fallthru
          _
        %s431 = sand.u32 %s38, 1
        %s432 = sand.u32 %s38, 1
        %s433 = smul.addr %s432, 128
        %s434 = scalar_lea.vmem [#allocation2], %s433
        %p435 = pneg %p51
        %p436 = pneg %p48
        %s437 = sand.u32 %s66, 1
        %s438 = sand.u32 %s66, 1
        %s439 = smul.addr %s438, 128
        %s440 = scalar_lea.vmem [#allocation3], %s439
        %p441 = pneg %p79
        %p442 = pneg %p76
        %p443 = pneg %p107
        %p444 = pneg %p104
        %s445 = sand.u32 %s94, 1
        %s446 = scalar_lea.sflag [#allocation5], %s445
        %s447 = sand.u32 %s94, 1
        %s448 = smul.addr %s447, 8
        %s449 = scalar_lea.vmem [#allocation4], %s448
        %s450 = smul.u32 16, %s20
        %s451 = ssub.s32 25, %s450
        %p452 = scmp.lt.s32.totalorder %s451, 16
        %s453 = scalar_select %p452, %s451, 16
        %s454 = smul.u32 8, %s453
        %s455 = smul.u32 16, %s21
        %v456 = vld [vmem:[%s420] sm:$0xff]
        %v457 = vld [vmem:[%s420 + $0x8] sm:$0xff]
        %v458 = vld [vmem:[%s420 + $0x10] sm:$0xff]
        %v459 = vld [vmem:[%s420 + $0x18] sm:$0xff]
        %v460 = vld [vmem:[%s420 + $0x20] sm:$0xff]
        %v461 = vld [vmem:[%s420 + $0x28] sm:$0xff]
        %v462 = vld [vmem:[%s420 + $0x30] sm:$0xff]
        %v463 = vld [vmem:[%s420 + $0x38] sm:$0xff]
        %v464 = vld [vmem:[%s420 + $0x40] sm:$0xff]
        %v465 = vld [vmem:[%s420 + $0x48] sm:$0xff]
        %v466 = vld [vmem:[%s420 + $0x50] sm:$0xff]
        %v467 = vld [vmem:[%s420 + $0x58] sm:$0xff]
        %v468 = vld [vmem:[%s420 + $0x60] sm:$0xff]
        %v469 = vld [vmem:[%s420 + $0x68] sm:$0xff]
        %v470 = vld [vmem:[%s420 + $0x70] sm:$0xff]
        %v471 = vld [vmem:[%s420 + $0x78] sm:$0xff]
        %v472 = vld [vmem:[%s427] sm:$0xff]
        %v473 = vld [vmem:[%s427 + $0x8] sm:$0xff]
        %v474 = vld [vmem:[%s427 + $0x10] sm:$0xff]
        %v475 = vld [vmem:[%s427 + $0x18] sm:$0xff]
        %v476 = vld [vmem:[%s427 + $0x20] sm:$0xff]
        %v477 = vld [vmem:[%s427 + $0x28] sm:$0xff]
        %v478 = vld [vmem:[%s427 + $0x30] sm:$0xff]
        %v479 = vld [vmem:[%s427 + $0x38] sm:$0xff]
        %v480 = vld [vmem:[%s427 + $0x40] sm:$0xff]
        %v481 = vld [vmem:[%s427 + $0x48] sm:$0xff]
        %v482 = vld [vmem:[%s427 + $0x50] sm:$0xff]
        %v483 = vld [vmem:[%s427 + $0x58] sm:$0xff]
        %v484 = vld [vmem:[%s427 + $0x60] sm:$0xff]
        %v485 = vld [vmem:[%s427 + $0x68] sm:$0xff]
        %v486 = vld [vmem:[%s427 + $0x70] sm:$0xff]
        %v487 = vld [vmem:[%s427 + $0x78] sm:$0xff]
        %488 = vxpose.xlu0.b32.start [1/16] %v472, 128
        %489 = vxpose.xlu0.b32.cont [2/16] %v473, 128
        %490 = vxpose.xlu0.b32.cont [3/16] %v474, 128
        %491 = vxpose.xlu0.b32.cont [4/16] %v475, 128
        %492 = vxpose.xlu0.b32.cont [5/16] %v476, 128
        %493 = vxpose.xlu0.b32.cont [6/16] %v477, 128
        %494 = vxpose.xlu0.b32.cont [7/16] %v478, 128
        %495 = vxpose.xlu0.b32.cont [8/16] %v479, 128
        %496 = vxpose.xlu0.b32.cont [9/16] %v480, 128
        %497 = vxpose.xlu0.b32.cont [10/16] %v481, 128
        %498 = vxpose.xlu0.b32.cont [11/16] %v482, 128
        %499 = vxpose.xlu0.b32.cont [12/16] %v483, 128
        %500 = vxpose.xlu0.b32.cont [13/16] %v484, 128
        %501 = vxpose.xlu0.b32.cont [14/16] %v485, 128
        %502 = vxpose.xlu0.b32.cont [15/16] %v486, 128
        %503 = vxpose.xlu0.b32.end [16/16] %v487, 128
        %v504 = vpop.trf.xlu0
        %v505 = vpop.trf.xlu0
        %v506 = vpop.trf.xlu0
        %v507 = vpop.trf.xlu0
        %v508 = vpop.trf.xlu0
        %v509 = vpop.trf.xlu0
        %v510 = vpop.trf.xlu0
        %v511 = vpop.trf.xlu0
        %v512 = vpop.trf.xlu0
        %v513 = vpop.trf.xlu0
        %v514 = vpop.trf.xlu0
        %v515 = vpop.trf.xlu0
        %v516 = vpop.trf.xlu0
        %v517 = vpop.trf.xlu0
        %v518 = vpop.trf.xlu0
        %v519 = vpop.trf.xlu0
        %v520 = vmul.f32 %v504, %v456
        %v521 = vmul.f32 %v505, %v457
        %v522 = vmul.f32 %v506, %v458
        %v523 = vmul.f32 %v507, %v459
        %v524 = vmul.f32 %v508, %v460
        %v525 = vmul.f32 %v509, %v461
        %v526 = vmul.f32 %v510, %v462
        %v527 = vmul.f32 %v511, %v463
        %v528 = vmul.f32 %v512, %v464
        %v529 = vmul.f32 %v513, %v465
        %v530 = vmul.f32 %v514, %v466
        %v531 = vmul.f32 %v515, %v467
        %v532 = vmul.f32 %v516, %v468
        %v533 = vmul.f32 %v517, %v469
        %v534 = vmul.f32 %v518, %v470
        %v535 = vmul.f32 %v519, %v471
        %v536 = vsub.f32 1.0, %v520
        %v537 = vsub.f32 1.0, %v521
        %v538 = vsub.f32 1.0, %v522
        %v539 = vsub.f32 1.0, %v523
        %v540 = vsub.f32 1.0, %v524
        %v541 = vsub.f32 1.0, %v525
        %v542 = vsub.f32 1.0, %v526
        %v543 = vsub.f32 1.0, %v527
        %v544 = vsub.f32 1.0, %v528
        %v545 = vsub.f32 1.0, %v529
        %v546 = vsub.f32 1.0, %v530
        %v547 = vsub.f32 1.0, %v531
        %v548 = vsub.f32 1.0, %v532
        %v549 = vsub.f32 1.0, %v533
        %v550 = vsub.f32 1.0, %v534
        %v551 = vsub.f32 1.0, %v535
        %v552 = vmax.f32 %v536, 0.0
        %v553 = vmax.f32 %v537, 0.0
        %v554 = vmax.f32 %v538, 0.0
        %v555 = vmax.f32 %v539, 0.0
        %v556 = vmax.f32 %v540, 0.0
        %v557 = vmax.f32 %v541, 0.0
        %v558 = vmax.f32 %v542, 0.0
        %v559 = vmax.f32 %v543, 0.0
        %v560 = vmax.f32 %v544, 0.0
        %v561 = vmax.f32 %v545, 0.0
        %v562 = vmax.f32 %v546, 0.0
        %v563 = vmax.f32 %v547, 0.0
        %v564 = vmax.f32 %v548, 0.0
        %v565 = vmax.f32 %v549, 0.0
        %v566 = vmax.f32 %v550, 0.0
        %v567 = vmax.f32 %v551, 0.0
        %s568 = smul.u32 %s20, 128
        %v569 = vlaneseq
        %v570 = vshrl.u32 %v569, 7
        %v571 = vadd.s32 %v570, 8
        %v572 = vadd.s32 %v570, 16
        %v573 = vadd.s32 %v570, 24
        %v574 = vadd.s32 %v570, 32
        %v575 = vadd.s32 %v570, 40
        %v576 = vadd.s32 %v570, 48
        %v577 = vadd.s32 %v570, 56
        %v578 = vadd.s32 %v570, 64
        %v579 = vadd.s32 %v570, 72
        %v580 = vadd.s32 %v570, 80
        %v581 = vadd.s32 %v570, 88
        %v582 = vadd.s32 %v570, 96
        %v583 = vadd.s32 %v570, 104
        %v584 = vadd.s32 %v570, 112
        %v585 = vadd.s32 %v570, 120
        %v586 = vstv %s568
        %v587 = vadd.s32 %v586, %v570
        %v588 = vadd.s32 %v586, %v571
        %v589 = vadd.s32 %v586, %v572
        %v590 = vadd.s32 %v586, %v573
        %v591 = vadd.s32 %v586, %v574
        %v592 = vadd.s32 %v586, %v575
        %v593 = vadd.s32 %v586, %v576
        %v594 = vadd.s32 %v586, %v577
        %v595 = vadd.s32 %v586, %v578
        %v596 = vadd.s32 %v586, %v579
        %v597 = vadd.s32 %v586, %v580
        %v598 = vadd.s32 %v586, %v581
        %v599 = vadd.s32 %v586, %v582
        %v600 = vadd.s32 %v586, %v583
        %v601 = vadd.s32 %v586, %v584
        %v602 = vadd.s32 %v586, %v585
        %s603 = smul.u32 %s21, 128
        %v604 = vlaneseq
        %v605 = vand.u32 %v604, 127
        %v606 = vstv %s603
        %v607 = vadd.s32 %v606, %v605
        %vm608 = vcmp.lt.s32.totalorder %v587, 200
        %vm609 = vcmp.lt.s32.totalorder %v588, 200
        %vm610 = vcmp.lt.s32.totalorder %v589, 200
        %vm611 = vcmp.lt.s32.totalorder %v590, 200
        %vm612 = vcmp.lt.s32.totalorder %v591, 200
        %vm613 = vcmp.lt.s32.totalorder %v592, 200
        %vm614 = vcmp.lt.s32.totalorder %v593, 200
        %vm615 = vcmp.lt.s32.totalorder %v594, 200
        %vm616 = vcmp.lt.s32.totalorder %v595, 200
        %vm617 = vcmp.lt.s32.totalorder %v596, 200
        %vm618 = vcmp.lt.s32.totalorder %v597, 200
        %vm619 = vcmp.lt.s32.totalorder %v598, 200
        %vm620 = vcmp.lt.s32.totalorder %v599, 200
        %vm621 = vcmp.lt.s32.totalorder %v600, 200
        %vm622 = vcmp.lt.s32.totalorder %v601, 200
        %vm623 = vcmp.lt.s32.totalorder %v602, 200
        %vm624 = vcmp.lt.s32.totalorder %v607, 384
        %vm625 = vmand %vm608, %vm624
        %vm626 = vmand %vm609, %vm624
        %vm627 = vmand %vm610, %vm624
        %vm628 = vmand %vm611, %vm624
        %vm629 = vmand %vm612, %vm624
        %vm630 = vmand %vm613, %vm624
        %vm631 = vmand %vm614, %vm624
        %vm632 = vmand %vm615, %vm624
        %vm633 = vmand %vm616, %vm624
        %vm634 = vmand %vm617, %vm624
        %vm635 = vmand %vm618, %vm624
        %vm636 = vmand %vm619, %vm624
        %vm637 = vmand %vm620, %vm624
        %vm638 = vmand %vm621, %vm624
        %vm639 = vmand %vm622, %vm624
        %vm640 = vmand %vm623, %vm624
        %v641 = vsel %vm625, %v552, 0.0
        %v642 = vsel %vm626, %v553, 0.0
        %v643 = vsel %vm627, %v554, 0.0
        %v644 = vsel %vm628, %v555, 0.0
        %v645 = vsel %vm629, %v556, 0.0
        %v646 = vsel %vm630, %v557, 0.0
        %v647 = vsel %vm631, %v558, 0.0
        %v648 = vsel %vm632, %v559, 0.0
        %v649 = vsel %vm633, %v560, 0.0
        %v650 = vsel %vm634, %v561, 0.0
        %v651 = vsel %vm635, %v562, 0.0
        %v652 = vsel %vm636, %v563, 0.0
        %v653 = vsel %vm637, %v564, 0.0
        %v654 = vsel %vm638, %v565, 0.0
        %v655 = vsel %vm639, %v566, 0.0
        %v656 = vsel %vm640, %v567, 0.0
        %v657 = vadd.f32 %v641, 0.0
        %v658 = vadd.f32 %v657, %v642
        %v659 = vadd.f32 %v658, %v643
        %v660 = vadd.f32 %v659, %v644
        %v661 = vadd.f32 %v660, %v645
        %v662 = vadd.f32 %v661, %v646
        %v663 = vadd.f32 %v662, %v647
        %v664 = vadd.f32 %v663, %v648
        %v665 = vadd.f32 %v664, %v649
        %v666 = vadd.f32 %v665, %v650
        %v667 = vadd.f32 %v666, %v651
        %v668 = vadd.f32 %v667, %v652
        %v669 = vadd.f32 %v668, %v653
        %v670 = vadd.f32 %v669, %v654
        %v671 = vadd.f32 %v670, %v655
        %v672 = vadd.f32 %v671, %v656
        %673 = vst [vmem:[%s449] sm:$0xff] %v672
        %s674 = sand.u32 %s94, 1
        %s675 = scalar_lea.sflag [#allocation5], %s674
        %s676 = sand.u32 %s94, 1
        %s677 = smul.addr %s676, 8
        %s678 = scalar_lea.vmem [#allocation4], %s677
        // Predicated region
        $region119: #{tpu_custom_call.1} parent=109 // pred_check
          %p679 = pneg %p104
        $region120: #{tpu_custom_call.1} parent=109 // pred_check_branch
          %681 = sbr.rel (%p679) target = $region122
        $region121: #{tpu_custom_call.1} parent=109 // pred_region
          %683 = vsyncadd %s675, 0
          %s684 = smul.addr %s20, 3
          %s685 = sadd.s32 %s21, %s684
          %s686 = smul.addr %s685, 8
          %s687 = scalar_lea.hbm %s2, %s686
          %s689 = sshll.u32 %s678, 4
          %s690 = int_to_ptr.vmem [resolvable:$true] %s689
          %s691 = sshll.u32 %s687, 4
          %s692 = int_to_ptr.hbm [resolvable:$true] %s691
          %694 = dma.vmem_to_hbm [thread:$0]  %s690, 128, %s692, %s675
        $region122: #{tpu_custom_call.1} parent=109 // pred_fallthru
          _
      $region110: #{tpu_custom_call.1} parent=5 // pred_fallthru
        _
      %p695 = scmp.le.s32.totalorder 2, %s11
      // Predicated region
      $region123: #{tpu_custom_call.1} parent=5 // pred_check
        %p696 = pneg %p695
      $region124: #{tpu_custom_call.1} parent=5 // pred_check_branch
        %698 = sbr.rel (%p696) target = $region126
      $region125: #{tpu_custom_call.1} parent=5 // pred_region
        %s699 = ssub.s32 %s11, 2
        // Predicated region
        $region127: #{tpu_custom_call.1} parent=125 // pred_check
          %p700 = pneg %p110
        $region128: #{tpu_custom_call.1} parent=125 // pred_check_branch
          %702 = sbr.rel (%p700) target = $region130
        $region129: #{tpu_custom_call.1} parent=125 // pred_region
          %s703 = sand.u32 %s95, 1
          %s704 = scalar_lea.sflag [#allocation5], %s703
          %s705 = sand.u32 %s95, 1
          %s706 = smul.addr %s705, 8
          %s707 = scalar_lea.vmem [#allocation4], %s706
          %709 = dma.done %s704, 128
        $region130: #{tpu_custom_call.1} parent=125 // pred_fallthru
          _
      $region126: #{tpu_custom_call.1} parent=5 // pred_fallthru
        _
    $region6: #{tpu_custom_call.1} parent=1 // loop_footer
      %s15 = sadd.s32 1, %s11
    $region7: #{tpu_custom_call.1} parent=1 // loop_footer_branch
      %10 = sbr.rel target = $region3
    $region8: #{tpu_custom_call.1} parent=1 // loop_exit
      _
    %710 = vsyncpa [#allocation5], 1
    %s711 = scalar_lea.sflag [#allocation5], 1
    %712 = vsyncpa %s711, 1

</llo_original>
